<compile_context>
chip_gen: v6e
topology: v6e:2x2x1
jax: 0.10.0
libtpu: 0.0.40
codegen_flags: <defaults>
</compile_context>

<pallas_src>
import functools

import jax
import jax.numpy as jnp
from jax.experimental import pallas as pl
from jax.experimental.pallas import tpu as pltpu

# Padded-lane sentinel for ||c||^2: exp(-(~1e30)) == 0.0 exactly in f32, so a
# padded output lane is exactly zero and never contaminates a fused consumer.
_PAD_BIG = 1e30

# 48 MiB is safe on every generation (v7x has 64 MiB physical; v5e/v6e 128 MiB)
# and far above our largest double-buffered working set (~12 MiB).
_VMEM_LIMIT = 48 * 1024 * 1024


def _round_up(x, m):
    return ((x + m - 1) // m) * m


def _pick_tile(dim, align, max_tile, candidates):
    """Pick a tile (multiple of `align`) minimizing padding waste.

    If the whole aligned dimension fits in one tile, use it (single grid step,
    zero waste).  Otherwise pick from `candidates`, minimizing
    round_up(dim, t) - dim, tie-broken toward the larger tile (fewer grid
    steps / DMA descriptors).
    """
    aligned = _round_up(dim, align)
    if aligned <= max_tile:
        return aligned
    best_t, best_waste = None, None
    for c in candidates:
        t = _round_up(min(c, max_tile), align)
        waste = _round_up(dim, t) - dim
        if (best_t is None or waste < best_waste
                or (waste == best_waste and t > best_t)):
            best_t, best_waste = t, waste
    return best_t


def _pad2d(a, shape):
    """Zero-pad a 2-D array up to `shape`; no-op (no extra HBM pass) if aligned."""
    if tuple(a.shape) == tuple(shape):
        return a
    return jnp.pad(a, ((0, shape[0] - a.shape[0]), (0, shape[1] - a.shape[1])))


def _make_aux(centres, sigmas, n_pad):
    """Pack [||c||^2 ; 1/sigma^2] into one (2, n_pad) stream.

    Padded lanes: ||c||^2 = _PAD_BIG, 1/sigma^2 = 1  ->  output lane = 0.
    """
    n = centres.shape[0]
    cc = jnp.full((n_pad,), _PAD_BIG, jnp.float32).at[:n].set(
        jnp.sum(centres * centres, axis=-1))
    isig = jnp.ones((n_pad,), jnp.float32).at[:n].set(1.0 / (sigmas * sigmas))
    return jnp.stack([cc, isig], axis=0)


# ---------------------------------------------------------------------------
# Fused two-layer kernel (used whenever the padded hidden/output dims fit in
# a single lane tile — always true for this network's demo sizes).
# ---------------------------------------------------------------------------
def _fused_kernel(x_ref, ct1_ref, aux1_ref, ct2_ref, aux2_ref, o_ref,
                  acc_ref, xx_ref, *, nk):
    """Grid = (row tiles, K steps).  ct* carry the folded factor of 2.

    x_ref:   (tm, tk)  input rows tile
    ct1_ref: (tk, Hp)  2 * centres1^T tile (K-sliced)
    aux1_ref:(2, Hp)   [||c1||^2 ; 1/sigma1^2]
    ct2_ref: (Hp, Op)  2 * centres2^T (resident)
    aux2_ref:(2, Op)   [||c2||^2 ; 1/sigma2^2]
    o_ref:   (tm, Op)  network output tile
    acc_ref: (tm, Hp)  f32 accumulator for 2 * x.c1 over K
    xx_ref:  (tm, 1)   f32 accumulator for ||x||^2 over K
    """
    x = x_ref[...]
    dot1 = jnp.dot(x, ct1_ref[...], preferred_element_type=jnp.float32)
    xsq = jnp.sum(x * x, axis=-1, keepdims=True)   # XLU reduce, free under MXU

    def epilogue(acc, xsum):
        aux1 = aux1_ref[...]
        sq1 = jnp.maximum(xsum - acc + aux1[0:1, :], 0.0)
        h = jnp.exp(-sq1 * aux1[1:2, :])           # layer-1 output, stays on-chip
        hh = jnp.sum(h * h, axis=-1, keepdims=True)
        dot2 = jnp.dot(h, ct2_ref[...], preferred_element_type=jnp.float32)
        aux2 = aux2_ref[...]
        sq2 = jnp.maximum(hh - dot2 + aux2[0:1, :], 0.0)
        o_ref[...] = jnp.exp(-sq2 * aux2[1:2, :]).astype(o_ref.dtype)

    if nk == 1:
        # Single K step: skip the VMEM accumulator round-trip entirely.
        epilogue(dot1, xsq)
    else:
        k = pl.program_id(1)

        @pl.when(k == 0)
        def _():
            acc_ref[...] = dot1
            xx_ref[...] = xsq

        @pl.when(k > 0)
        def _():
            acc_ref[...] = acc_ref[...] + dot1
            xx_ref[...] = xx_ref[...] + xsq

        @pl.when(k == nk - 1)
        def _():
            epilogue(acc_ref[...], xx_ref[...])


def gaussian_network_fused(x, centres1, sigmas1, centres2, sigmas2):
    """x: (B, Din) -> (B, Dout2), both GaussianLayers in one pallas_call."""
    x = x.astype(jnp.float32)
    centres1 = centres1.astype(jnp.float32)
    sigmas1 = sigmas1.astype(jnp.float32)
    centres2 = centres2.astype(jnp.float32)
    sigmas2 = sigmas2.astype(jnp.float32)

    B, Din = x.shape
    Hd = centres1.shape[0]
    Od = centres2.shape[0]
    Hp = _round_up(Hd, 128)
    Op = _round_up(Od, 128)

    tm = _pick_tile(B, 8, 512, (128, 256, 512))
    tk = _pick_tile(Din, 128, 2048, (512, 1024, 2048))
    Mp = _round_up(B, tm)
    Kp = _round_up(Din, tk)
    nk = Kp // tk

    xp = _pad2d(x, (Mp, Kp))
    ct1 = _pad2d(2.0 * centres1.T, (Kp, Hp))   # fold the 2 of -2 x.c into c^T
    ct2 = _pad2d(2.0 * centres2.T, (Hp, Op))
    aux1 = _make_aux(centres1, sigmas1, Hp)
    aux2 = _make_aux(centres2, sigmas2, Op)

    out = pl.pallas_call(
        functools.partial(_fused_kernel, nk=nk),
        out_shape=jax.ShapeDtypeStruct((Mp, Op), jnp.float32),
        grid_spec=pltpu.PrefetchScalarGridSpec(
            num_scalar_prefetch=0,
            grid=(Mp // tm, nk),
            in_specs=[
                pl.BlockSpec((tm, tk), lambda i, k: (i, k)),    # x rows tile
                pl.BlockSpec((tk, Hp), lambda i, k: (k, 0)),    # 2*c1^T K tile
                pl.BlockSpec((2, Hp), lambda i, k: (0, 0)),     # [cc1; 1/s1^2]
                pl.BlockSpec((Hp, Op), lambda i, k: (0, 0)),    # 2*c2^T
                pl.BlockSpec((2, Op), lambda i, k: (0, 0)),     # [cc2; 1/s2^2]
            ],
            out_specs=pl.BlockSpec((tm, Op), lambda i, k: (i, 0)),
            scratch_shapes=[pltpu.VMEM((tm, Hp), jnp.float32),
                            pltpu.VMEM((tm, 1), jnp.float32)],
        ),
        compiler_params=pltpu.CompilerParams(
            dimension_semantics=("parallel", "arbitrary"),
            vmem_limit_bytes=_VMEM_LIMIT,
        ),
    )(xp, ct1, aux1, ct2, aux2)

    return out[:B, :Od]


# ---------------------------------------------------------------------------
# Single-layer tiled kernel (general fallback when hidden/output dims are too
# wide for the fused path).
# ---------------------------------------------------------------------------
def _layer_kernel(x_ref, ct_ref, aux_ref, o_ref, acc_ref, xx_ref, *, nk):
    x = x_ref[...]
    dot1 = jnp.dot(x, ct_ref[...], preferred_element_type=jnp.float32)
    xsq = jnp.sum(x * x, axis=-1, keepdims=True)

    def epilogue(acc, xsum):
        aux = aux_ref[...]
        sq = jnp.maximum(xsum - acc + aux[0:1, :], 0.0)
        o_ref[...] = jnp.exp(-sq * aux[1:2, :]).astype(o_ref.dtype)

    if nk == 1:
        epilogue(dot1, xsq)
    else:
        k = pl.program_id(2)

        @pl.when(k == 0)
        def _():
            acc_ref[...] = dot1
            xx_ref[...] = xsq

        @pl.when(k > 0)
        def _():
            acc_ref[...] = acc_ref[...] + dot1
            xx_ref[...] = xx_ref[...] + xsq

        @pl.when(k == nk - 1)
        def _():
            epilogue(acc_ref[...], xx_ref[...])


def gaussian_layer(x, centres, sigmas):
    """x: (B, Din), centres: (Dout, Din), sigmas: (Dout,) -> (B, Dout) f32."""
    x = x.astype(jnp.float32)
    centres = centres.astype(jnp.float32)
    sigmas = sigmas.astype(jnp.float32)

    B, Din = x.shape
    Dout = centres.shape[0]

    tm = _pick_tile(B, 8, 512, (128, 256, 512))
    tn = _pick_tile(Dout, 128, 512, (128, 256, 512))
    tk = _pick_tile(Din, 128, 2048, (512, 1024, 2048))
    Mp = _round_up(B, tm)
    Np = _round_up(Dout, tn)
    Kp = _round_up(Din, tk)
    nk = Kp // tk

    xp = _pad2d(x, (Mp, Kp))
    ctp = _pad2d(2.0 * centres.T, (Kp, Np))
    aux = _make_aux(centres, sigmas, Np)

    out = pl.pallas_call(
        functools.partial(_layer_kernel, nk=nk),
        out_shape=jax.ShapeDtypeStruct((Mp, Np), jnp.float32),
        grid_spec=pltpu.PrefetchScalarGridSpec(
            num_scalar_prefetch=0,
            grid=(Mp // tm, Np // tn, nk),
            in_specs=[
                pl.BlockSpec((tm, tk), lambda i, j, k: (i, k)),
                pl.BlockSpec((tk, tn), lambda i, j, k: (k, j)),
                pl.BlockSpec((2, tn), lambda i, j, k: (0, j)),
            ],
            out_specs=pl.BlockSpec((tm, tn), lambda i, j, k: (i, j)),
            scratch_shapes=[pltpu.VMEM((tm, tn), jnp.float32),
                            pltpu.VMEM((tm, 1), jnp.float32)],
        ),
        compiler_params=pltpu.CompilerParams(
            dimension_semantics=("parallel", "parallel", "arbitrary"),
            vmem_limit_bytes=_VMEM_LIMIT,
        ),
    )(xp, ctp, aux)

    return out[:B, :Dout]


# ---------------------------------------------------------------------------
# Network
# ---------------------------------------------------------------------------
class GaussianNetworkParams:
    """Deterministic parameter construction mirroring GaussianNetwork.__init__."""

    def __init__(self, input_dim, hidden_dim, output_dim, key):
        k1, k2 = jax.random.split(key)
        # GaussianLayer.reset_parameters: centres ~ U(-1, 1), sigmas = 1
        self.centres1 = jax.random.uniform(
            k1, (hidden_dim, input_dim), jnp.float32, minval=-1.0, maxval=1.0)
        self.sigmas1 = jnp.ones((hidden_dim,), jnp.float32)
        self.centres2 = jax.random.uniform(
            k2, (output_dim, hidden_dim), jnp.float32, minval=-1.0, maxval=1.0)
        self.sigmas2 = jnp.ones((output_dim,), jnp.float32)


def gaussian_network_forward(x, params):
    """x: (B, C, H, W) NCHW (or any shape with a leading batch dim)."""
    B = x.shape[0]
    x = x.reshape(B, -1).astype(jnp.float32)        # x.view(B, -1)

    Hp = _round_up(params.centres1.shape[0], 128)
    Op = _round_up(params.centres2.shape[0], 128)
    if Hp <= 512 and Op <= 512:
        # Fused path: intermediate h never touches HBM, one kernel launch.
        return gaussian_network_fused(x, params.centres1, params.sigmas1,
                                      params.centres2, params.sigmas2)
    # Fallback for very wide hidden/output layers: two tiled kernels.
    h = gaussian_layer(x, params.centres1, params.sigmas1)
    return gaussian_layer(h, params.centres2, params.sigmas2)


def _reference_forward(x, params):
    """Pure-JAX reference (direct broadcast form, mirrors the PyTorch code)."""
    B = x.shape[0]
    x = x.reshape(B, -1).astype(jnp.float32)

    def layer(inp, centres, sigmas):
        diff = inp[:, None, :] - centres[None, :, :]
        dist = jnp.sqrt(jnp.sum(diff * diff, axis=-1)) / sigmas[None, :]
        return jnp.exp(-(dist ** 2))

    h = layer(x, params.centres1, params.sigmas1)
    return layer(h, params.centres2, params.sigmas2)


if __name__ == "__main__":
    key = jax.random.PRNGKey(0)
    k_x, k_p = jax.random.split(key)

    # NCHW input (B=2, C=4, H=16, W=16) -> input_dim = 1024
    B, C, H, W = 2, 4, 16, 16
    input_dim = C * H * W
    hidden_dim = 32
    output_dim = 16

    x = jax.random.normal(k_x, (B, C, H, W), jnp.float32)
    params = GaussianNetworkParams(input_dim, hidden_dim, output_dim, k_p)

    # sigmas are learnable parameters; use non-trivial values scaled to the
    # layer width so the outputs are numerically meaningful (with sigma=1 and
    # Din=1024 every output underflows to 0).
    params.sigmas1 = jnp.full((hidden_dim,), jnp.sqrt(float(input_dim)),
                              jnp.float32)
    params.sigmas2 = jnp.full((output_dim,), jnp.sqrt(float(hidden_dim)),
                              jnp.float32)

    fwd = jax.jit(lambda inp: gaussian_network_forward(inp, params))
    out = jax.block_until_ready(fwd(x))

    ref = _reference_forward(x, params)
    assert out.shape == (B, output_dim), out.shape
    assert jnp.allclose(out, ref, atol=1e-4, rtol=1e-4), (
        float(jnp.max(jnp.abs(out - ref))))

    print("KERNEL_OK")
</pallas_src>

<mosaic_0001>
module attributes {stable_mosaic.version = 11 : i64} {
  func.func @_fused_kernel(%arg0: i32, %arg1: i32, %arg2: memref<8x1024xf32, #tpu.memory_space<vmem>>, %arg3: memref<1024x128xf32, #tpu.memory_space<vmem>>, %arg4: memref<2x128xf32, #tpu.memory_space<vmem>>, %arg5: memref<128x128xf32, #tpu.memory_space<vmem>>, %arg6: memref<2x128xf32, #tpu.memory_space<vmem>>, %arg7: memref<8x128xf32, #tpu.memory_space<vmem>>, %arg8: memref<8x128xf32, #tpu.memory_space<vmem>>, %arg9: memref<8x1xf32, #tpu.memory_space<vmem>>) attributes {dimension_semantics = [#tpu.dimension_semantics<parallel>, #tpu.dimension_semantics<arbitrary>], iteration_bounds = array<i64: 1, 1>, scalar_prefetch = 0 : i64, scratch_operands = 2 : i64, tpu.core_type = #tpu.core_type<tc>, window_params = [{transform_indices = @transform_0, window_bounds = array<i64: 8, 1024>}, {transform_indices = @transform_1, window_bounds = array<i64: 1024, 128>}, {pipeline_mode = #tpu.pipeline_mode<synchronous>, transform_indices = @transform_2, window_bounds = array<i64: 2, 128>}, {pipeline_mode = #tpu.pipeline_mode<synchronous>, transform_indices = @transform_3, window_bounds = array<i64: 128, 128>}, {pipeline_mode = #tpu.pipeline_mode<synchronous>, transform_indices = @transform_4, window_bounds = array<i64: 2, 128>}, {transform_indices = @transform_5, window_bounds = array<i64: 8, 128>}]} {
    %c0 = arith.constant 0 : index
    %c0_0 = arith.constant 0 : index
    %0 = vector.load %arg2[%c0, %c0_0] : memref<8x1024xf32, #tpu.memory_space<vmem>>, vector<8x1024xf32>
    %c0_1 = arith.constant 0 : index
    %c0_2 = arith.constant 0 : index
    %1 = vector.load %arg3[%c0_1, %c0_2] : memref<1024x128xf32, #tpu.memory_space<vmem>>, vector<1024x128xf32>
    %cst = arith.constant dense<0.000000e+00> : vector<8x128xf32>
    %2 = tpu.matmul %0, %1, %cst {dimension_numbers = #tpu.dot_dimension_numbers<[1], [0], [0], [1], [0, 0, 1, 1], [], []>} : vector<8x1024xf32>, vector<1024x128xf32>, vector<8x128xf32> -> vector<8x128xf32>
    %3 = arith.mulf %0, %0 : vector<8x1024xf32>
    %cst_3 = arith.constant dense<0.000000e+00> : vector<8xf32>
    %4 = vector.multi_reduction <add>, %3, %cst_3 [1] : vector<8x1024xf32> to vector<8xf32>
    %5 = vector.shape_cast %4 : vector<8xf32> to vector<8x1xf32>
    %c0_4 = arith.constant 0 : index
    %c0_5 = arith.constant 0 : index
    %6 = vector.load %arg4[%c0_4, %c0_5] : memref<2x128xf32, #tpu.memory_space<vmem>>, vector<2x128xf32>
    %7 = vector.broadcast %5 : vector<8x1xf32> to vector<8x128xf32>
    %8 = arith.subf %7, %2 : vector<8x128xf32>
    %9 = vector.extract_strided_slice %6 {offsets = [0, 0], sizes = [1, 128], strides = [1, 1]} : vector<2x128xf32> to vector<1x128xf32>
    %10 = vector.broadcast %9 : vector<1x128xf32> to vector<8x128xf32>
    %11 = arith.addf %8, %10 : vector<8x128xf32>
    %cst_6 = arith.constant 0.000000e+00 : f32
    %12 = vector.broadcast %cst_6 : f32 to vector<8x128xf32>
    %13 = arith.maximumf %11, %12 : vector<8x128xf32>
    %cst_7 = arith.constant 0.000000e+00 : f32
    %14 = vector.broadcast %cst_7 : f32 to vector<8x128xf32>
    %15 = arith.subf %14, %13 : vector<8x128xf32>
    %16 = vector.extract_strided_slice %6 {offsets = [1, 0], sizes = [1, 128], strides = [1, 1]} : vector<2x128xf32> to vector<1x128xf32>
    %17 = vector.broadcast %16 : vector<1x128xf32> to vector<8x128xf32>
    %18 = arith.mulf %15, %17 : vector<8x128xf32>
    %19 = math.exp %18 : vector<8x128xf32>
    %20 = arith.mulf %19, %19 : vector<8x128xf32>
    %cst_8 = arith.constant dense<0.000000e+00> : vector<8xf32>
    %21 = vector.multi_reduction <add>, %20, %cst_8 [1] : vector<8x128xf32> to vector<8xf32>
    %22 = vector.shape_cast %21 : vector<8xf32> to vector<8x1xf32>
    %c0_9 = arith.constant 0 : index
    %c0_10 = arith.constant 0 : index
    %23 = vector.load %arg5[%c0_9, %c0_10] : memref<128x128xf32, #tpu.memory_space<vmem>>, vector<128x128xf32>
    %cst_11 = arith.constant dense<0.000000e+00> : vector<8x128xf32>
    %24 = tpu.matmul %19, %23, %cst_11 {dimension_numbers = #tpu.dot_dimension_numbers<[1], [0], [0], [1], [0, 0, 1, 1], [], []>} : vector<8x128xf32>, vector<128x128xf32>, vector<8x128xf32> -> vector<8x128xf32>
    %c0_12 = arith.constant 0 : index
    %c0_13 = arith.constant 0 : index
    %25 = vector.load %arg6[%c0_12, %c0_13] : memref<2x128xf32, #tpu.memory_space<vmem>>, vector<2x128xf32>
    %26 = vector.broadcast %22 : vector<8x1xf32> to vector<8x128xf32>
    %27 = arith.subf %26, %24 : vector<8x128xf32>
    %28 = vector.extract_strided_slice %25 {offsets = [0, 0], sizes = [1, 128], strides = [1, 1]} : vector<2x128xf32> to vector<1x128xf32>
    %29 = vector.broadcast %28 : vector<1x128xf32> to vector<8x128xf32>
    %30 = arith.addf %27, %29 : vector<8x128xf32>
    %cst_14 = arith.constant 0.000000e+00 : f32
    %31 = vector.broadcast %cst_14 : f32 to vector<8x128xf32>
    %32 = arith.maximumf %30, %31 : vector<8x128xf32>
    %cst_15 = arith.constant 0.000000e+00 : f32
    %33 = vector.broadcast %cst_15 : f32 to vector<8x128xf32>
    %34 = arith.subf %33, %32 : vector<8x128xf32>
    %35 = vector.extract_strided_slice %25 {offsets = [1, 0], sizes = [1, 128], strides = [1, 1]} : vector<2x128xf32> to vector<1x128xf32>
    %36 = vector.broadcast %35 : vector<1x128xf32> to vector<8x128xf32>
    %37 = arith.mulf %34, %36 : vector<8x128xf32>
    %38 = math.exp %37 : vector<8x128xf32>
    %c0_16 = arith.constant 0 : index
    %c0_17 = arith.constant 0 : index
    %39 = vector.load %arg7[%c0_16, %c0_17] : memref<8x128xf32, #tpu.memory_space<vmem>>, vector<8x128xf32>
    tpu.vector_store %arg7[%c0_16, %c0_17], %38 {strides = array<i32>} : memref<8x128xf32, #tpu.memory_space<vmem>>, vector<8x128xf32>,
    return
  }
  func.func @transform_0(%arg0: i32, %arg1: i32) -> (i32, i32) {
    %c0_i32 = arith.constant 0 : i32
    return %arg0, %arg1 : i32, i32
  }
  func.func @transform_1(%arg0: i32, %arg1: i32) -> (i32, i32) {
    %c0_i32 = arith.constant 0 : i32
    %c0_i32_0 = arith.constant 0 : i32
    return %arg1, %c0_i32 : i32, i32
  }
  func.func @transform_2(%arg0: i32, %arg1: i32) -> (i32, i32) {
    %c0_i32 = arith.constant 0 : i32
    %c0_i32_0 = arith.constant 0 : i32
    %c0_i32_1 = arith.constant 0 : i32
    return %c0_i32, %c0_i32_0 : i32, i32
  }
  func.func @transform_3(%arg0: i32, %arg1: i32) -> (i32, i32) {
    %c0_i32 = arith.constant 0 : i32
    %c0_i32_0 = arith.constant 0 : i32
    %c0_i32_1 = arith.constant 0 : i32
    return %c0_i32, %c0_i32_0 : i32, i32
  }
  func.func @transform_4(%arg0: i32, %arg1: i32) -> (i32, i32) {
    %c0_i32 = arith.constant 0 : i32
    %c0_i32_0 = arith.constant 0 : i32
    %c0_i32_1 = arith.constant 0 : i32
    return %c0_i32, %c0_i32_0 : i32, i32
  }
  func.func @transform_5(%arg0: i32, %arg1: i32) -> (i32, i32) {
    %c0_i32 = arith.constant 0 : i32
    %c0_i32_0 = arith.constant 0 : i32
    return %arg0, %c0_i32 : i32, i32
  }
}

</mosaic_0001>

<llo_original>
// kernel: _lambda_.1
$region0: #{_lambda_.1}
  #allocation0 [shape = 'u32[]', space=smem, size = 0x4, offset = 0x4, fixed_abs, tag = 'smem constant byte address 0x4 - core index']
  #allocation1 [shape = 'u32[144,128]{1,0:T(1,128)}', space=vmem, size = 0x12000, scoped, tag = 'internal scratch']
  #allocation2 [shape = 'f32[8,128]{1,0:T(8,128)}', space=vmem, size = 0x1000, scoped, tag = 'scratch operand']
  #allocation3 [shape = 'f32[8,1]{1,0:T(8,128)}', space=vmem, size = 0x1000, scoped, tag = 'scratch operand']
  %s0 = inlined_call_operand.vmem [shape: f32[8,1024], index: 0, kind: input, shape index: {}]
  %s1 = inlined_call_operand.hbm [shape: f32[1024,128], index: 1, kind: input, shape index: {}]
  %s2 = inlined_call_operand.vmem [shape: f32[2,128], index: 2, kind: input, shape index: {}]
  %s3 = inlined_call_operand.vmem [shape: f32[128,128], index: 3, kind: input, shape index: {}]
  %s4 = inlined_call_operand.vmem [shape: f32[2,128], index: 4, kind: input, shape index: {}]
  %s5 = inlined_call_operand.vmem [shape: f32[8,128], index: 5, kind: output, shape index: {}]
  %s6 = sld [smem:[#allocation0]]
  $region34: #{_lambda_.1} parent=0
    _
  %s8 = ssub.s32 1, %s6
  %s9 = scalar_select 0, %s8, %s6
  $region1: #{_lambda_.1} parent=0
    #allocation4 [shape = 'u8[524288]{0}', space=vmem, size = 0x80000, scoped, tag = 'input window, operand 1, single buffered']
    #allocation5 [shape = 's32[1]{0}', space=sflag, size = 0x4, scoped, tag = 'scoped memory for _lambda_.1']
    %10 = vsyncpa [#allocation5], 0
    // Predicated region
    $region2: #{_lambda_.1} parent=1 // pred_check
      _
    $region3: #{_lambda_.1} parent=1 // pred_check_branch
      %12 = sbr.rel (0) target = $region5
    $region4: #{_lambda_.1} parent=1 // pred_region
      _
    $region5: #{_lambda_.1} parent=1 // pred_fallthru
      _
    // Predicated region
    $region6: #{_lambda_.1} parent=1 // pred_check
      _
    $region7: #{_lambda_.1} parent=1 // pred_check_branch
      %14 = sbr.rel (0) target = $region9
    $region8: #{_lambda_.1} parent=1 // pred_region
      %s16 = ssub.s32 16384, 16384
      %17 = vsyncadd [#allocation5], %s16
      %s18 = sshll.u32 [#allocation4], 4
      %s19 = int_to_ptr.vmem [resolvable:$true] %s18
      %24 = dma.hbm_to_vmem [thread:$0]  %s1, 16384, %s19, [#allocation5], 128, 128, 8
    $region9: #{_lambda_.1} parent=1 // pred_fallthru
      _
    // Predicated region
    $region10: #{_lambda_.1} parent=1 // pred_check
      _
    $region11: #{_lambda_.1} parent=1 // pred_check_branch
      %26 = sbr.rel (0) target = $region13
    $region12: #{_lambda_.1} parent=1 // pred_region
      _
    $region13: #{_lambda_.1} parent=1 // pred_fallthru
      _
    // Predicated region
    $region14: #{_lambda_.1} parent=1 // pred_check
      _
    $region15: #{_lambda_.1} parent=1 // pred_check_branch
      %28 = sbr.rel (0) target = $region17
    $region16: #{_lambda_.1} parent=1 // pred_region
      _
    $region17: #{_lambda_.1} parent=1 // pred_fallthru
      _
    // Predicated region
    $region18: #{_lambda_.1} parent=1 // pred_check
      _
    $region19: #{_lambda_.1} parent=1 // pred_check_branch
      %30 = sbr.rel (0) target = $region21
    $region20: #{_lambda_.1} parent=1 // pred_region
      _
    $region21: #{_lambda_.1} parent=1 // pred_fallthru
      _
    // Predicated region
    $region22: #{_lambda_.1} parent=1 // pred_check
      _
    $region23: #{_lambda_.1} parent=1 // pred_check_branch
      %32 = sbr.rel (0) target = $region25
    $region24: #{_lambda_.1} parent=1 // pred_region
      %33 = dma.done [#allocation5], 16384
    $region25: #{_lambda_.1} parent=1 // pred_fallthru
      _
    %v34 = vld [vmem:[%s0] sm:$0xff]
    %v35 = vld [vmem:[%s0 + $0x8] sm:$0xff]
    %v36 = vld [vmem:[%s0 + $0x10] sm:$0xff]
    %v37 = vld [vmem:[%s0 + $0x18] sm:$0xff]
    %v38 = vld [vmem:[%s0 + $0x20] sm:$0xff]
    %v39 = vld [vmem:[%s0 + $0x28] sm:$0xff]
    %v40 = vld [vmem:[%s0 + $0x30] sm:$0xff]
    %v41 = vld [vmem:[%s0 + $0x38] sm:$0xff]
    %v42 = vld [vmem:[#allocation4] sm:$0xff]
    %v43 = vld [vmem:[#allocation4 + $0x8] sm:$0xff]
    %v44 = vld [vmem:[#allocation4 + $0x10] sm:$0xff]
    %v45 = vld [vmem:[#allocation4 + $0x18] sm:$0xff]
    %v46 = vld [vmem:[#allocation4 + $0x20] sm:$0xff]
    %v47 = vld [vmem:[#allocation4 + $0x28] sm:$0xff]
    %v48 = vld [vmem:[#allocation4 + $0x30] sm:$0xff]
    %v49 = vld [vmem:[#allocation4 + $0x38] sm:$0xff]
    %v50 = vld [vmem:[#allocation4 + $0x40] sm:$0xff]
    %v51 = vld [vmem:[#allocation4 + $0x48] sm:$0xff]
    %v52 = vld [vmem:[#allocation4 + $0x50] sm:$0xff]
    %v53 = vld [vmem:[#allocation4 + $0x58] sm:$0xff]
    %v54 = vld [vmem:[#allocation4 + $0x60] sm:$0xff]
    %v55 = vld [vmem:[#allocation4 + $0x68] sm:$0xff]
    %v56 = vld [vmem:[#allocation4 + $0x70] sm:$0xff]
    %v57 = vld [vmem:[#allocation4 + $0x78] sm:$0xff]
    %v58 = vld [vmem:[#allocation4 + $0x80] sm:$0xff]
    %v59 = vld [vmem:[#allocation4 + $0x88] sm:$0xff]
    %v60 = vld [vmem:[#allocation4 + $0x90] sm:$0xff]
    %v61 = vld [vmem:[#allocation4 + $0x98] sm:$0xff]
    %v62 = vld [vmem:[#allocation4 + $0xa0] sm:$0xff]
    %v63 = vld [vmem:[#allocation4 + $0xa8] sm:$0xff]
    %v64 = vld [vmem:[#allocation4 + $0xb0] sm:$0xff]
    %v65 = vld [vmem:[#allocation4 + $0xb8] sm:$0xff]
    %v66 = vld [vmem:[#allocation4 + $0xc0] sm:$0xff]
    %v67 = vld [vmem:[#allocation4 + $0xc8] sm:$0xff]
    %v68 = vld [vmem:[#allocation4 + $0xd0] sm:$0xff]
    %v69 = vld [vmem:[#allocation4 + $0xd8] sm:$0xff]
    %v70 = vld [vmem:[#allocation4 + $0xe0] sm:$0xff]
    %v71 = vld [vmem:[#allocation4 + $0xe8] sm:$0xff]
    %v72 = vld [vmem:[#allocation4 + $0xf0] sm:$0xff]
    %v73 = vld [vmem:[#allocation4 + $0xf8] sm:$0xff]
    %v74 = vld [vmem:[#allocation4 + $0x100] sm:$0xff]
    %v75 = vld [vmem:[#allocation4 + $0x108] sm:$0xff]
    %v76 = vld [vmem:[#allocation4 + $0x110] sm:$0xff]
    %v77 = vld [vmem:[#allocation4 + $0x118] sm:$0xff]
    %v78 = vld [vmem:[#allocation4 + $0x120] sm:$0xff]
    %v79 = vld [vmem:[#allocation4 + $0x128] sm:$0xff]
    %v80 = vld [vmem:[#allocation4 + $0x130] sm:$0xff]
    %v81 = vld [vmem:[#allocation4 + $0x138] sm:$0xff]
    %v82 = vld [vmem:[#allocation4 + $0x140] sm:$0xff]
    %v83 = vld [vmem:[#allocation4 + $0x148] sm:$0xff]
    %v84 = vld [vmem:[#allocation4 + $0x150] sm:$0xff]
    %v85 = vld [vmem:[#allocation4 + $0x158] sm:$0xff]
    %v86 = vld [vmem:[#allocation4 + $0x160] sm:$0xff]
    %v87 = vld [vmem:[#allocation4 + $0x168] sm:$0xff]
    %v88 = vld [vmem:[#allocation4 + $0x170] sm:$0xff]
    %v89 = vld [vmem:[#allocation4 + $0x178] sm:$0xff]
    %v90 = vld [vmem:[#allocation4 + $0x180] sm:$0xff]
    %v91 = vld [vmem:[#allocation4 + $0x188] sm:$0xff]
    %v92 = vld [vmem:[#allocation4 + $0x190] sm:$0xff]
    %v93 = vld [vmem:[#allocation4 + $0x198] sm:$0xff]
    %v94 = vld [vmem:[#allocation4 + $0x1a0] sm:$0xff]
    %v95 = vld [vmem:[#allocation4 + $0x1a8] sm:$0xff]
    %v96 = vld [vmem:[#allocation4 + $0x1b0] sm:$0xff]
    %v97 = vld [vmem:[#allocation4 + $0x1b8] sm:$0xff]
    %v98 = vld [vmem:[#allocation4 + $0x1c0] sm:$0xff]
    %v99 = vld [vmem:[#allocation4 + $0x1c8] sm:$0xff]
    %v100 = vld [vmem:[#allocation4 + $0x1d0] sm:$0xff]
    %v101 = vld [vmem:[#allocation4 + $0x1d8] sm:$0xff]
    %v102 = vld [vmem:[#allocation4 + $0x1e0] sm:$0xff]
    %v103 = vld [vmem:[#allocation4 + $0x1e8] sm:$0xff]
    %v104 = vld [vmem:[#allocation4 + $0x1f0] sm:$0xff]
    %v105 = vld [vmem:[#allocation4 + $0x1f8] sm:$0xff]
    %v106 = vld [vmem:[#allocation4 + $0x200] sm:$0xff]
    %v107 = vld [vmem:[#allocation4 + $0x208] sm:$0xff]
    %v108 = vld [vmem:[#allocation4 + $0x210] sm:$0xff]
    %v109 = vld [vmem:[#allocation4 + $0x218] sm:$0xff]
    %v110 = vld [vmem:[#allocation4 + $0x220] sm:$0xff]
    %v111 = vld [vmem:[#allocation4 + $0x228] sm:$0xff]
    %v112 = vld [vmem:[#allocation4 + $0x230] sm:$0xff]
    %v113 = vld [vmem:[#allocation4 + $0x238] sm:$0xff]
    %v114 = vld [vmem:[#allocation4 + $0x240] sm:$0xff]
    %v115 = vld [vmem:[#allocation4 + $0x248] sm:$0xff]
    %v116 = vld [vmem:[#allocation4 + $0x250] sm:$0xff]
    %v117 = vld [vmem:[#allocation4 + $0x258] sm:$0xff]
    %v118 = vld [vmem:[#allocation4 + $0x260] sm:$0xff]
    %v119 = vld [vmem:[#allocation4 + $0x268] sm:$0xff]
    %v120 = vld [vmem:[#allocation4 + $0x270] sm:$0xff]
    %v121 = vld [vmem:[#allocation4 + $0x278] sm:$0xff]
    %v122 = vld [vmem:[#allocation4 + $0x280] sm:$0xff]
    %v123 = vld [vmem:[#allocation4 + $0x288] sm:$0xff]
    %v124 = vld [vmem:[#allocation4 + $0x290] sm:$0xff]
    %v125 = vld [vmem:[#allocation4 + $0x298] sm:$0xff]
    %v126 = vld [vmem:[#allocation4 + $0x2a0] sm:$0xff]
    %v127 = vld [vmem:[#allocation4 + $0x2a8] sm:$0xff]
    %v128 = vld [vmem:[#allocation4 + $0x2b0] sm:$0xff]
    %v129 = vld [vmem:[#allocation4 + $0x2b8] sm:$0xff]
    %v130 = vld [vmem:[#allocation4 + $0x2c0] sm:$0xff]
    %v131 = vld [vmem:[#allocation4 + $0x2c8] sm:$0xff]
    %v132 = vld [vmem:[#allocation4 + $0x2d0] sm:$0xff]
    %v133 = vld [vmem:[#allocation4 + $0x2d8] sm:$0xff]
    %v134 = vld [vmem:[#allocation4 + $0x2e0] sm:$0xff]
    %v135 = vld [vmem:[#allocation4 + $0x2e8] sm:$0xff]
    %v136 = vld [vmem:[#allocation4 + $0x2f0] sm:$0xff]
    %v137 = vld [vmem:[#allocation4 + $0x2f8] sm:$0xff]
    %v138 = vld [vmem:[#allocation4 + $0x300] sm:$0xff]
    %v139 = vld [vmem:[#allocation4 + $0x308] sm:$0xff]
    %v140 = vld [vmem:[#allocation4 + $0x310] sm:$0xff]
    %v141 = vld [vmem:[#allocation4 + $0x318] sm:$0xff]
    %v142 = vld [vmem:[#allocation4 + $0x320] sm:$0xff]
    %v143 = vld [vmem:[#allocation4 + $0x328] sm:$0xff]
    %v144 = vld [vmem:[#allocation4 + $0x330] sm:$0xff]
    %v145 = vld [vmem:[#allocation4 + $0x338] sm:$0xff]
    %v146 = vld [vmem:[#allocation4 + $0x340] sm:$0xff]
    %v147 = vld [vmem:[#allocation4 + $0x348] sm:$0xff]
    %v148 = vld [vmem:[#allocation4 + $0x350] sm:$0xff]
    %v149 = vld [vmem:[#allocation4 + $0x358] sm:$0xff]
    %v150 = vld [vmem:[#allocation4 + $0x360] sm:$0xff]
    %v151 = vld [vmem:[#allocation4 + $0x368] sm:$0xff]
    %v152 = vld [vmem:[#allocation4 + $0x370] sm:$0xff]
    %v153 = vld [vmem:[#allocation4 + $0x378] sm:$0xff]
    %v154 = vld [vmem:[#allocation4 + $0x380] sm:$0xff]
    %v155 = vld [vmem:[#allocation4 + $0x388] sm:$0xff]
    %v156 = vld [vmem:[#allocation4 + $0x390] sm:$0xff]
    %v157 = vld [vmem:[#allocation4 + $0x398] sm:$0xff]
    %v158 = vld [vmem:[#allocation4 + $0x3a0] sm:$0xff]
    %v159 = vld [vmem:[#allocation4 + $0x3a8] sm:$0xff]
    %v160 = vld [vmem:[#allocation4 + $0x3b0] sm:$0xff]
    %v161 = vld [vmem:[#allocation4 + $0x3b8] sm:$0xff]
    %v162 = vld [vmem:[#allocation4 + $0x3c0] sm:$0xff]
    %v163 = vld [vmem:[#allocation4 + $0x3c8] sm:$0xff]
    %v164 = vld [vmem:[#allocation4 + $0x3d0] sm:$0xff]
    %v165 = vld [vmem:[#allocation4 + $0x3d8] sm:$0xff]
    %v166 = vld [vmem:[#allocation4 + $0x3e0] sm:$0xff]
    %v167 = vld [vmem:[#allocation4 + $0x3e8] sm:$0xff]
    %v168 = vld [vmem:[#allocation4 + $0x3f0] sm:$0xff]
    %v169 = vld [vmem:[#allocation4 + $0x3f8] sm:$0xff]
    %170 = vmatprep.subr.mxu0 0.0
    %171 = vmatpush1.msra.mxu0 %v57
    %172 = vmatprep.subr.mxu0 0.0
    %173 = vmatpush1.msra.mxu0 %v56
    %174 = vmatprep.subr.mxu0 0.0
    %175 = vmatpush1.msra.mxu0 %v55
    %176 = vmatprep.subr.mxu0 0.0
    %177 = vmatpush1.msra.mxu0 %v54
    %178 = vmatprep.subr.mxu0 0.0
    %179 = vmatpush1.msra.mxu0 %v53
    %180 = vmatprep.subr.mxu0 0.0
    %181 = vmatpush1.msra.mxu0 %v52
    %182 = vmatprep.subr.mxu0 0.0
    %183 = vmatpush1.msra.mxu0 %v51
    %184 = vmatprep.subr.mxu0 0.0
    %185 = vmatpush1.msra.mxu0 %v50
    %186 = vmatprep.subr.mxu0 0.0
    %187 = vmatpush1.msra.mxu0 %v49
    %188 = vmatprep.subr.mxu0 0.0
    %189 = vmatpush1.msra.mxu0 %v48
    %190 = vmatprep.subr.mxu0 0.0
    %191 = vmatpush1.msra.mxu0 %v47
    %192 = vmatprep.subr.mxu0 0.0
    %193 = vmatpush1.msra.mxu0 %v46
    %194 = vmatprep.subr.mxu0 0.0
    %195 = vmatpush1.msra.mxu0 %v45
    %196 = vmatprep.subr.mxu0 0.0
    %197 = vmatpush1.msra.mxu0 %v44
    %198 = vmatprep.subr.mxu0 0.0
    %199 = vmatpush1.msra.mxu0 %v43
    %200 = vmatprep.subr.mxu0 0.0
    %201 = vmatpush1.msra.mxu0 %v42
    %202 = vmatprep.subr.mxu0 0.0
    %203 = vmatpush2.msra.mxu0 %v73
    %204 = vmatprep.subr.mxu0 0.0
    %205 = vmatpush2.msra.mxu0 %v72
    %206 = vmatprep.subr.mxu0 0.0
    %207 = vmatpush2.msra.mxu0 %v71
    %208 = vmatprep.subr.mxu0 0.0
    %209 = vmatpush2.msra.mxu0 %v70
    %210 = vmatprep.subr.mxu0 0.0
    %211 = vmatpush2.msra.mxu0 %v69
    %212 = vmatprep.subr.mxu0 0.0
    %213 = vmatpush2.msra.mxu0 %v68
    %214 = vmatprep.subr.mxu0 0.0
    %215 = vmatpush2.msra.mxu0 %v67
    %216 = vmatprep.subr.mxu0 0.0
    %217 = vmatpush2.msra.mxu0 %v66
    %218 = vmatprep.subr.mxu0 0.0
    %219 = vmatpush2.msra.mxu0 %v65
    %220 = vmatprep.subr.mxu0 0.0
    %221 = vmatpush2.msra.mxu0 %v64
    %222 = vmatprep.subr.mxu0 0.0
    %223 = vmatpush2.msra.mxu0 %v63
    %224 = vmatprep.subr.mxu0 0.0
    %225 = vmatpush2.msra.mxu0 %v62
    %226 = vmatprep.subr.mxu0 0.0
    %227 = vmatpush2.msra.mxu0 %v61
    %228 = vmatprep.subr.mxu0 0.0
    %229 = vmatpush2.msra.mxu0 %v60
    %230 = vmatprep.subr.mxu0 0.0
    %231 = vmatpush2.msra.mxu0 %v59
    %232 = vmatprep.subr.mxu0 0.0
    %233 = vmatpush2.msra.mxu0 %v58
    %234 = vmatprep.mubr.f32.mxu0 %v35
    %235 = vmatmul.mubr.f32.gmra.mxu0 %v34
    %v236 = vpop.f32.mrf.mxu0
    %v237 = vadd.f32 0.0, %v236
    %v238 = vpop.f32.mrf.mxu0
    %239 = vdwg.mxu0
    %240 = vmatprep.subr.mxu0 0.0
    %241 = vmatpush1.msra.mxu0 %v89
    %242 = vmatprep.subr.mxu0 0.0
    %243 = vmatpush1.msra.mxu0 %v88
    %244 = vmatprep.subr.mxu0 0.0
    %245 = vmatpush1.msra.mxu0 %v87
    %246 = vmatprep.subr.mxu0 0.0
    %247 = vmatpush1.msra.mxu0 %v86
    %248 = vmatprep.subr.mxu0 0.0
    %249 = vmatpush1.msra.mxu0 %v85
    %250 = vmatprep.subr.mxu0 0.0
    %251 = vmatpush1.msra.mxu0 %v84
    %252 = vmatprep.subr.mxu0 0.0
    %253 = vmatpush1.msra.mxu0 %v83
    %254 = vmatprep.subr.mxu0 0.0
    %255 = vmatpush1.msra.mxu0 %v82
    %256 = vmatprep.subr.mxu0 0.0
    %257 = vmatpush1.msra.mxu0 %v81
    %258 = vmatprep.subr.mxu0 0.0
    %259 = vmatpush1.msra.mxu0 %v80
    %260 = vmatprep.subr.mxu0 0.0
    %261 = vmatpush1.msra.mxu0 %v79
    %262 = vmatprep.subr.mxu0 0.0
    %263 = vmatpush1.msra.mxu0 %v78
    %264 = vmatprep.subr.mxu0 0.0
    %265 = vmatpush1.msra.mxu0 %v77
    %266 = vmatprep.subr.mxu0 0.0
    %267 = vmatpush1.msra.mxu0 %v76
    %268 = vmatprep.subr.mxu0 0.0
    %269 = vmatpush1.msra.mxu0 %v75
    %270 = vmatprep.subr.mxu0 0.0
    %271 = vmatpush1.msra.mxu0 %v74
    %272 = vmatprep.subr.mxu0 0.0
    %273 = vmatpush2.msra.mxu0 %v105
    %274 = vmatprep.subr.mxu0 0.0
    %275 = vmatpush2.msra.mxu0 %v104
    %276 = vmatprep.subr.mxu0 0.0
    %277 = vmatpush2.msra.mxu0 %v103
    %278 = vmatprep.subr.mxu0 0.0
    %279 = vmatpush2.msra.mxu0 %v102
    %280 = vmatprep.subr.mxu0 0.0
    %281 = vmatpush2.msra.mxu0 %v101
    %282 = vmatprep.subr.mxu0 0.0
    %283 = vmatpush2.msra.mxu0 %v100
    %284 = vmatprep.subr.mxu0 0.0
    %285 = vmatpush2.msra.mxu0 %v99
    %286 = vmatprep.subr.mxu0 0.0
    %287 = vmatpush2.msra.mxu0 %v98
    %288 = vmatprep.subr.mxu0 0.0
    %289 = vmatpush2.msra.mxu0 %v97
    %290 = vmatprep.subr.mxu0 0.0
    %291 = vmatpush2.msra.mxu0 %v96
    %292 = vmatprep.subr.mxu0 0.0
    %293 = vmatpush2.msra.mxu0 %v95
    %294 = vmatprep.subr.mxu0 0.0
    %295 = vmatpush2.msra.mxu0 %v94
    %296 = vmatprep.subr.mxu0 0.0
    %297 = vmatpush2.msra.mxu0 %v93
    %298 = vmatprep.subr.mxu0 0.0
    %299 = vmatpush2.msra.mxu0 %v92
    %300 = vmatprep.subr.mxu0 0.0
    %301 = vmatpush2.msra.mxu0 %v91
    %302 = vmatprep.subr.mxu0 0.0
    %303 = vmatpush2.msra.mxu0 %v90
    %304 = vmatprep.mubr.f32.mxu0 %v37
    %305 = vmatmul.mubr.f32.gmra.mxu0 %v36
    %v306 = vpop.f32.mrf.mxu0
    %v307 = vadd.f32 %v237, %v306
    %v308 = vpop.f32.mrf.mxu0
    %309 = vdwg.mxu0
    %310 = vmatprep.subr.mxu0 0.0
    %311 = vmatpush1.msra.mxu0 %v121
    %312 = vmatprep.subr.mxu0 0.0
    %313 = vmatpush1.msra.mxu0 %v120
    %314 = vmatprep.subr.mxu0 0.0
    %315 = vmatpush1.msra.mxu0 %v119
    %316 = vmatprep.subr.mxu0 0.0
    %317 = vmatpush1.msra.mxu0 %v118
    %318 = vmatprep.subr.mxu0 0.0
    %319 = vmatpush1.msra.mxu0 %v117
    %320 = vmatprep.subr.mxu0 0.0
    %321 = vmatpush1.msra.mxu0 %v116
    %322 = vmatprep.subr.mxu0 0.0
    %323 = vmatpush1.msra.mxu0 %v115
    %324 = vmatprep.subr.mxu0 0.0
    %325 = vmatpush1.msra.mxu0 %v114
    %326 = vmatprep.subr.mxu0 0.0
    %327 = vmatpush1.msra.mxu0 %v113
    %328 = vmatprep.subr.mxu0 0.0
    %329 = vmatpush1.msra.mxu0 %v112
    %330 = vmatprep.subr.mxu0 0.0
    %331 = vmatpush1.msra.mxu0 %v111
    %332 = vmatprep.subr.mxu0 0.0
    %333 = vmatpush1.msra.mxu0 %v110
    %334 = vmatprep.subr.mxu0 0.0
    %335 = vmatpush1.msra.mxu0 %v109
    %336 = vmatprep.subr.mxu0 0.0
    %337 = vmatpush1.msra.mxu0 %v108
    %338 = vmatprep.subr.mxu0 0.0
    %339 = vmatpush1.msra.mxu0 %v107
    %340 = vmatprep.subr.mxu0 0.0
    %341 = vmatpush1.msra.mxu0 %v106
    %342 = vmatprep.subr.mxu0 0.0
    %343 = vmatpush2.msra.mxu0 %v137
    %344 = vmatprep.subr.mxu0 0.0
    %345 = vmatpush2.msra.mxu0 %v136
    %346 = vmatprep.subr.mxu0 0.0
    %347 = vmatpush2.msra.mxu0 %v135
    %348 = vmatprep.subr.mxu0 0.0
    %349 = vmatpush2.msra.mxu0 %v134
    %350 = vmatprep.subr.mxu0 0.0
    %351 = vmatpush2.msra.mxu0 %v133
    %352 = vmatprep.subr.mxu0 0.0
    %353 = vmatpush2.msra.mxu0 %v132
    %354 = vmatprep.subr.mxu0 0.0
    %355 = vmatpush2.msra.mxu0 %v131
    %356 = vmatprep.subr.mxu0 0.0
    %357 = vmatpush2.msra.mxu0 %v130
    %358 = vmatprep.subr.mxu0 0.0
    %359 = vmatpush2.msra.mxu0 %v129
    %360 = vmatprep.subr.mxu0 0.0
    %361 = vmatpush2.msra.mxu0 %v128
    %362 = vmatprep.subr.mxu0 0.0
    %363 = vmatpush2.msra.mxu0 %v127
    %364 = vmatprep.subr.mxu0 0.0
    %365 = vmatpush2.msra.mxu0 %v126
    %366 = vmatprep.subr.mxu0 0.0
    %367 = vmatpush2.msra.mxu0 %v125
    %368 = vmatprep.subr.mxu0 0.0
    %369 = vmatpush2.msra.mxu0 %v124
    %370 = vmatprep.subr.mxu0 0.0
    %371 = vmatpush2.msra.mxu0 %v123
    %372 = vmatprep.subr.mxu0 0.0
    %373 = vmatpush2.msra.mxu0 %v122
    %374 = vmatprep.mubr.f32.mxu0 %v39
    %375 = vmatmul.mubr.f32.gmra.mxu0 %v38
    %v376 = vpop.f32.mrf.mxu0
    %v377 = vadd.f32 %v307, %v376
    %v378 = vpop.f32.mrf.mxu0
    %379 = vdwg.mxu0
    %380 = vmatprep.subr.mxu0 0.0
    %381 = vmatpush1.msra.mxu0 %v153
    %382 = vmatprep.subr.mxu0 0.0
    %383 = vmatpush1.msra.mxu0 %v152
    %384 = vmatprep.subr.mxu0 0.0
    %385 = vmatpush1.msra.mxu0 %v151
    %386 = vmatprep.subr.mxu0 0.0
    %387 = vmatpush1.msra.mxu0 %v150
    %388 = vmatprep.subr.mxu0 0.0
    %389 = vmatpush1.msra.mxu0 %v149
    %390 = vmatprep.subr.mxu0 0.0
    %391 = vmatpush1.msra.mxu0 %v148
    %392 = vmatprep.subr.mxu0 0.0
    %393 = vmatpush1.msra.mxu0 %v147
    %394 = vmatprep.subr.mxu0 0.0
    %395 = vmatpush1.msra.mxu0 %v146
    %396 = vmatprep.subr.mxu0 0.0
    %397 = vmatpush1.msra.mxu0 %v145
    %398 = vmatprep.subr.mxu0 0.0
    %399 = vmatpush1.msra.mxu0 %v144
    %400 = vmatprep.subr.mxu0 0.0
    %401 = vmatpush1.msra.mxu0 %v143
    %402 = vmatprep.subr.mxu0 0.0
    %403 = vmatpush1.msra.mxu0 %v142
    %404 = vmatprep.subr.mxu0 0.0
    %405 = vmatpush1.msra.mxu0 %v141
    %406 = vmatprep.subr.mxu0 0.0
    %407 = vmatpush1.msra.mxu0 %v140
    %408 = vmatprep.subr.mxu0 0.0
    %409 = vmatpush1.msra.mxu0 %v139
    %410 = vmatprep.subr.mxu0 0.0
    %411 = vmatpush1.msra.mxu0 %v138
    %412 = vmatprep.subr.mxu0 0.0
    %413 = vmatpush2.msra.mxu0 %v169
    %414 = vmatprep.subr.mxu0 0.0
    %415 = vmatpush2.msra.mxu0 %v168
    %416 = vmatprep.subr.mxu0 0.0
    %417 = vmatpush2.msra.mxu0 %v167
    %418 = vmatprep.subr.mxu0 0.0
    %419 = vmatpush2.msra.mxu0 %v166
    %420 = vmatprep.subr.mxu0 0.0
    %421 = vmatpush2.msra.mxu0 %v165
    %422 = vmatprep.subr.mxu0 0.0
    %423 = vmatpush2.msra.mxu0 %v164
    %424 = vmatprep.subr.mxu0 0.0
    %425 = vmatpush2.msra.mxu0 %v163
    %426 = vmatprep.subr.mxu0 0.0
    %427 = vmatpush2.msra.mxu0 %v162
    %428 = vmatprep.subr.mxu0 0.0
    %429 = vmatpush2.msra.mxu0 %v161
    %430 = vmatprep.subr.mxu0 0.0
    %431 = vmatpush2.msra.mxu0 %v160
    %432 = vmatprep.subr.mxu0 0.0
    %433 = vmatpush2.msra.mxu0 %v159
    %434 = vmatprep.subr.mxu0 0.0
    %435 = vmatpush2.msra.mxu0 %v158
    %436 = vmatprep.subr.mxu0 0.0
    %437 = vmatpush2.msra.mxu0 %v157
    %438 = vmatprep.subr.mxu0 0.0
    %439 = vmatpush2.msra.mxu0 %v156
    %440 = vmatprep.subr.mxu0 0.0
    %441 = vmatpush2.msra.mxu0 %v155
    %442 = vmatprep.subr.mxu0 0.0
    %443 = vmatpush2.msra.mxu0 %v154
    %444 = vmatprep.mubr.f32.mxu0 %v41
    %445 = vmatmul.mubr.f32.gmra.mxu0 %v40
    %v446 = vpop.f32.mrf.mxu0
    %v447 = vadd.f32 %v377, %v446
    %v448 = vpop.f32.mrf.mxu0
    %449 = vdwg.mxu0
    %v450 = vmul.f32 %v34, %v34
    %v451 = vmul.f32 %v35, %v35
    %v452 = vmul.f32 %v36, %v36
    %v453 = vmul.f32 %v37, %v37
    %v454 = vmul.f32 %v38, %v38
    %v455 = vmul.f32 %v39, %v39
    %v456 = vmul.f32 %v40, %v40
    %v457 = vmul.f32 %v41, %v41
    %v458 = vadd.f32 %v450, %v451
    %v459 = vadd.f32 %v458, %v452
    %v460 = vadd.f32 %v459, %v453
    %v461 = vadd.f32 %v460, %v454
    %v462 = vadd.f32 %v461, %v455
    %v463 = vadd.f32 %v462, %v456
    %v464 = vadd.f32 %v463, %v457
    %465 = vadd.xlane.f32.xlu0 %v464
    %v466 = vpop.xlane.xlu0 %465
    %v467 = vld [vmem:[%s2] sm:$0x3]
    %v468 = vsub.f32 %v466, %v447
    %v469 = vlaneseq
    %v470 = vshrl.u32 %v469, 7
    %v471 = vsub.s32 0, %v470
    %v472 = vrot.slane %v467, %v471
    %v473 = vadd.f32 %v468, %v472
    %v474 = vmax.f32 %v473, 0.0
    %v475 = vsub.f32 0.0, %v474
    %v476 = vlaneseq
    %v477 = vshrl.u32 %v476, 7
    %v478 = vsub.s32 1, %v477
    %v479 = vrot.slane %v467, %v478
    %v480 = vmul.f32 %v475, %v479
    %v481 = vmul.f32 %v480, 1.442695
    %v482 = vpow.pop %v481
    %v483 = vmul.f32 %v482, %v482
    %484 = vadd.xlane.f32.xlu0 %v483
    %v485 = vpop.xlane.xlu0 %484
    %v486 = vld [vmem:[%s3] sm:$0xff]
    %v487 = vld [vmem:[%s3 + $0x8] sm:$0xff]
    %v488 = vld [vmem:[%s3 + $0x10] sm:$0xff]
    %v489 = vld [vmem:[%s3 + $0x18] sm:$0xff]
    %v490 = vld [vmem:[%s3 + $0x20] sm:$0xff]
    %v491 = vld [vmem:[%s3 + $0x28] sm:$0xff]
    %v492 = vld [vmem:[%s3 + $0x30] sm:$0xff]
    %v493 = vld [vmem:[%s3 + $0x38] sm:$0xff]
    %v494 = vld [vmem:[%s3 + $0x40] sm:$0xff]
    %v495 = vld [vmem:[%s3 + $0x48] sm:$0xff]
    %v496 = vld [vmem:[%s3 + $0x50] sm:$0xff]
    %v497 = vld [vmem:[%s3 + $0x58] sm:$0xff]
    %v498 = vld [vmem:[%s3 + $0x60] sm:$0xff]
    %v499 = vld [vmem:[%s3 + $0x68] sm:$0xff]
    %v500 = vld [vmem:[%s3 + $0x70] sm:$0xff]
    %v501 = vld [vmem:[%s3 + $0x78] sm:$0xff]
    %502 = vmatprep.subr.mxu0 0.0
    %503 = vmatpush1.msra.mxu0 %v501
    %504 = vmatprep.subr.mxu0 0.0
    %505 = vmatpush1.msra.mxu0 %v500
    %506 = vmatprep.subr.mxu0 0.0
    %507 = vmatpush1.msra.mxu0 %v499
    %508 = vmatprep.subr.mxu0 0.0
    %509 = vmatpush1.msra.mxu0 %v498
    %510 = vmatprep.subr.mxu0 0.0
    %511 = vmatpush1.msra.mxu0 %v497
    %512 = vmatprep.subr.mxu0 0.0
    %513 = vmatpush1.msra.mxu0 %v496
    %514 = vmatprep.subr.mxu0 0.0
    %515 = vmatpush1.msra.mxu0 %v495
    %516 = vmatprep.subr.mxu0 0.0
    %517 = vmatpush1.msra.mxu0 %v494
    %518 = vmatprep.subr.mxu0 0.0
    %519 = vmatpush1.msra.mxu0 %v493
    %520 = vmatprep.subr.mxu0 0.0
    %521 = vmatpush1.msra.mxu0 %v492
    %522 = vmatprep.subr.mxu0 0.0
    %523 = vmatpush1.msra.mxu0 %v491
    %524 = vmatprep.subr.mxu0 0.0
    %525 = vmatpush1.msra.mxu0 %v490
    %526 = vmatprep.subr.mxu0 0.0
    %527 = vmatpush1.msra.mxu0 %v489
    %528 = vmatprep.subr.mxu0 0.0
    %529 = vmatpush1.msra.mxu0 %v488
    %530 = vmatprep.subr.mxu0 0.0
    %531 = vmatpush1.msra.mxu0 %v487
    %532 = vmatprep.subr.mxu0 0.0
    %533 = vmatpush1.msra.mxu0 %v486
    %534 = vmatprep.subr.mxu0 0.0
    %535 = vmatpush2.msra.mxu0 0.0
    %536 = vmatprep.subr.mxu0 0.0
    %537 = vmatpush2.msra.mxu0 0.0
    %538 = vmatprep.subr.mxu0 0.0
    %539 = vmatpush2.msra.mxu0 0.0
    %540 = vmatprep.subr.mxu0 0.0
    %541 = vmatpush2.msra.mxu0 0.0
    %542 = vmatprep.subr.mxu0 0.0
    %543 = vmatpush2.msra.mxu0 0.0
    %544 = vmatprep.subr.mxu0 0.0
    %545 = vmatpush2.msra.mxu0 0.0
    %546 = vmatprep.subr.mxu0 0.0
    %547 = vmatpush2.msra.mxu0 0.0
    %548 = vmatprep.subr.mxu0 0.0
    %549 = vmatpush2.msra.mxu0 0.0
    %550 = vmatprep.subr.mxu0 0.0
    %551 = vmatpush2.msra.mxu0 0.0
    %552 = vmatprep.subr.mxu0 0.0
    %553 = vmatpush2.msra.mxu0 0.0
    %554 = vmatprep.subr.mxu0 0.0
    %555 = vmatpush2.msra.mxu0 0.0
    %556 = vmatprep.subr.mxu0 0.0
    %557 = vmatpush2.msra.mxu0 0.0
    %558 = vmatprep.subr.mxu0 0.0
    %559 = vmatpush2.msra.mxu0 0.0
    %560 = vmatprep.subr.mxu0 0.0
    %561 = vmatpush2.msra.mxu0 0.0
    %562 = vmatprep.subr.mxu0 0.0
    %563 = vmatpush2.msra.mxu0 0.0
    %564 = vmatprep.subr.mxu0 0.0
    %565 = vmatpush2.msra.mxu0 0.0
    %566 = vmatprep.mubr.f32.mxu0 0.0
    %567 = vmatmul.mubr.f32.gmra.mxu0 %v482
    %v568 = vpop.f32.mrf.mxu0
    %v569 = vadd.f32 0.0, %v568
    %v570 = vpop.f32.mrf.mxu0
    %571 = vdwg.mxu0
    %v572 = vld [vmem:[%s4] sm:$0x3]
    %v573 = vsub.f32 %v485, %v569
    %v574 = vlaneseq
    %v575 = vshrl.u32 %v574, 7
    %v576 = vsub.s32 0, %v575
    %v577 = vrot.slane %v572, %v576
    %v578 = vadd.f32 %v573, %v577
    %v579 = vmax.f32 %v578, 0.0
    %v580 = vsub.f32 0.0, %v579
    %v581 = vlaneseq
    %v582 = vshrl.u32 %v581, 7
    %v583 = vsub.s32 1, %v582
    %v584 = vrot.slane %v572, %v583
    %v585 = vmul.f32 %v580, %v584
    %v586 = vmul.f32 %v585, 1.442695
    %v587 = vpow.pop %v586
    %588 = vst [vmem:[%s5] sm:$0xff] %v587
    // Predicated region
    $region26: #{_lambda_.1} parent=1 // pred_check
      _
    $region27: #{_lambda_.1} parent=1 // pred_check_branch
      %590 = sbr.rel (0) target = $region29
    $region28: #{_lambda_.1} parent=1 // pred_region
      _
    $region29: #{_lambda_.1} parent=1 // pred_fallthru
      _
    // Predicated region
    $region30: #{_lambda_.1} parent=1 // pred_check
      _
    $region31: #{_lambda_.1} parent=1 // pred_check_branch
      %592 = sbr.rel (0) target = $region33
    $region32: #{_lambda_.1} parent=1 // pred_region
      _
    $region33: #{_lambda_.1} parent=1 // pred_fallthru
      _
    %593 = vsyncpa [#allocation5], 1

</llo_original>
